<compile_context>
chip_gen: v7x
topology: tpu7x:2x2x1
jax: 0.10.0
libtpu: 0.0.40
codegen_flags: <defaults>
</compile_context>

<pallas_src>
import jax
import jax.numpy as jnp
from jax import lax
from jax.experimental import pallas as pl
from jax.experimental.pallas import tpu as pltpu

_SUBLANES = 8     # f32 sublane tile height
_LANES = 128      # lane width


def embedding_model_forward(x_nchw, labels, params):
    """Forward pass.  x_nchw: (B, C, H, W) float32.  labels unused (softmax branch)."""
    del labels  # unused in the 'softmax' branch; kept for API parity
    B, C, H, W = x_nchw.shape
    S = H * W
    # channels-first, spatial on lanes: just a reshape, NO HBM transpose.
    x_mat = x_nchw.reshape(B, C, S)

    wc = params["w_conv"]    # (F, C)   1x1 conv weight (out, in)
    bc = params["b_conv"]    # (F, 1)
    we = params["w_enc"]     # (F, E)   stored (in, out)
    be = params["b_enc"]     # (1, E)
    alpha = params["alpha"]  # (1, 1)   PReLU (num_parameters=1)
    wf = params["w_fc"]      # (E, NC)  stored (in, out)
    bf = params["b_fc"]      # (1, NC)

    F = wc.shape[0]
    E = we.shape[1]
    NC = wf.shape[1]

    # Pack the fc weight with an identity block so one lane-dense row carries
    # [x_fc | x_embed | zeros]:  row = e @ w_pack + b_pack.
    PAD = max(_LANES, -(-(NC + E) // _LANES) * _LANES)
    w_pack = jnp.zeros((E, PAD), jnp.float32)
    w_pack = w_pack.at[:, :NC].set(wf.astype(jnp.float32))
    w_pack = w_pack.at[:, NC:NC + E].set(jnp.eye(E, dtype=jnp.float32))
    b_pack = jnp.zeros((1, PAD), jnp.float32).at[:, :NC].set(bf.astype(jnp.float32))

    # Spatial chunking: lane-aligned chunks pipeline the input DMA against the
    # conv matmul.  (For very large S, bump TS toward 512 to approach the HBM
    # roofline; 128 keeps this toy size actually exercising the accumulator.)
    TS = _LANES if S % _LANES == 0 else S
    ns = S // TS
    inv_s = 1.0 / float(S)

    def kernel(x_ref, wc_ref, bc_ref, we_ref, be_ref, alpha_ref,
               wp_ref, bp_ref, out_ref, acc_ref):
        si = pl.program_id(1)

        @pl.when(si == 0)
        def _init():
            acc_ref[...] = jnp.zeros_like(acc_ref)

        # --- backbone: 1x1 conv on this spatial chunk (MXU) + ReLU -----------
        x2 = x_ref[0]                                         # (C, TS)
        h = jnp.dot(wc_ref[...], x2,
                    preferred_element_type=jnp.float32)       # (F, TS)
        h = jnp.maximum(h + bc_ref[...], 0.0)                 # bias (F,1) + ReLU

        # --- global average pool: MXU reduction, 1/S folded into the vector --
        pool_vec = jnp.full((1, TS), inv_s, dtype=jnp.float32)
        acc_ref[...] += lax.dot_general(
            pool_vec, h,
            dimension_numbers=(((1,), (1,)), ((), ())),       # (1,TS) · (F,TS)^T
            preferred_element_type=jnp.float32)               # (1, F)

        @pl.when(si == pl.num_programs(1) - 1)
        def _finalize():
            feat = acc_ref[...]                               # (1, F), already the mean
            # encoder: Linear(F -> E) + PReLU(num_parameters=1)
            e = jnp.dot(feat, we_ref[...],
                        preferred_element_type=jnp.float32) + be_ref[...]
            a = alpha_ref[0, 0]                               # scalar from SMEM
            e = jnp.where(e >= 0.0, e, a * e)                 # (1, E)
            # packed fc: [x_fc | x_embed | 0...] in one lane-dense row
            row = jnp.dot(e, wp_ref[...],
                          preferred_element_type=jnp.float32) + bp_ref[...]
            out_ref[...] = jnp.broadcast_to(row[:, None, :], out_ref.shape)

    out3 = pl.pallas_call(
        kernel,
        out_shape=jax.ShapeDtypeStruct((B, _SUBLANES, PAD), jnp.float32),
        grid=(B, ns),
        in_specs=[
            pl.BlockSpec((1, C, TS), lambda b, si: (b, 0, si)),   # x chunk
            pl.BlockSpec((F, C), lambda b, si: (0, 0)),           # w_conv
            pl.BlockSpec((F, 1), lambda b, si: (0, 0)),           # b_conv
            pl.BlockSpec((F, E), lambda b, si: (0, 0)),           # w_enc
            pl.BlockSpec((1, E), lambda b, si: (0, 0)),           # b_enc
            pl.BlockSpec(memory_space=pltpu.MemorySpace.SMEM),    # PReLU alpha
            pl.BlockSpec((E, PAD), lambda b, si: (0, 0)),         # w_pack
            pl.BlockSpec((1, PAD), lambda b, si: (0, 0)),         # b_pack
        ],
        out_specs=pl.BlockSpec((1, _SUBLANES, PAD), lambda b, si: (b, 0, 0)),
        scratch_shapes=[pltpu.VMEM((1, F), jnp.float32)],
        compiler_params=pltpu.CompilerParams(
            dimension_semantics=("parallel", "arbitrary"),
            vmem_limit_bytes=32 * 1024 * 1024),
    )(x_mat, wc, bc, we, be, alpha, w_pack, b_pack)

    x_fc = out3[:, 0, :NC]
    x_embed = out3[:, 0, NC:NC + E]
    loss = jnp.zeros((1, 1), jnp.float32)   # 'softmax' branch: constant zero loss
    return x_fc, x_embed, loss


def init_params(key, in_channels, input_feat_size, embed_dim, num_classes):
    """Deterministic PyTorch-style uniform(-1/sqrt(fan_in), 1/sqrt(fan_in)) init."""
    ks = jax.random.split(key, 6)

    def unif(k, shape, fan_in):
        bound = 1.0 / float(fan_in) ** 0.5
        return jax.random.uniform(k, shape, jnp.float32, -bound, bound)

    F, E, NC, C = input_feat_size, embed_dim, num_classes, in_channels
    return {
        "w_conv": unif(ks[0], (F, C), C),   # conv1x1 weight (out, in)
        "b_conv": unif(ks[1], (F, 1), C),
        "w_enc":  unif(ks[2], (F, E), F),   # Linear stored as (in, out)
        "b_enc":  unif(ks[3], (1, E), F),
        "alpha":  jnp.full((1, 1), 0.25, jnp.float32),  # PReLU default init
        "w_fc":   unif(ks[4], (E, NC), E),
        "b_fc":   unif(ks[5], (1, NC), E),
    }


def reference_forward(x_nchw, params):
    """Pure-JAX f32 reference of the same forward (highest precision)."""
    B, C, H, W = x_nchw.shape
    hp = lax.Precision.HIGHEST
    x = x_nchw.reshape(B, C, H * W)
    h = jnp.einsum("fc,bcs->bfs", params["w_conv"], x, precision=hp)
    h = jnp.maximum(h + params["b_conv"][None, :, :], 0.0)
    feat = jnp.mean(h, axis=-1)                                        # (B, F)
    e = jnp.dot(feat, params["w_enc"], precision=hp) + params["b_enc"]
    a = params["alpha"][0, 0]
    e = jnp.where(e >= 0.0, e, a * e)
    x_fc = jnp.dot(e, params["w_fc"], precision=hp) + params["b_fc"]
    return x_fc, e, jnp.zeros((1, 1), jnp.float32)


if __name__ == "__main__":
    B, C, H, W = 2, 4, 16, 16
    INPUT_FEAT_SIZE = 32
    EMBED_DIM = 8
    NUM_CLASSES = 16

    key = jax.random.PRNGKey(0)
    k_x, k_p = jax.random.split(key)
    x = jax.random.normal(k_x, (B, C, H, W), jnp.float32)
    labels = jnp.zeros((B,), jnp.int32)          # unused in softmax branch
    params = init_params(k_p, C, INPUT_FEAT_SIZE, EMBED_DIM, NUM_CLASSES)

    fwd = jax.jit(embedding_model_forward)
    x_fc, x_embed, loss = fwd(x, labels, params)
    jax.block_until_ready((x_fc, x_embed, loss))

    assert x_fc.shape == (B, NUM_CLASSES)
    assert x_embed.shape == (B, EMBED_DIM)
    assert loss.shape == (1, 1)

    r_fc, r_embed, _ = reference_forward(x, params)
    assert jnp.allclose(x_fc, r_fc, atol=1e-3, rtol=1e-3), "x_fc mismatch vs reference"
    assert jnp.allclose(x_embed, r_embed, atol=1e-3, rtol=1e-3), "x_embed mismatch vs reference"
    assert float(jnp.abs(loss).max()) == 0.0

    print("KERNEL_OK")
</pallas_src>

<mosaic_0001>
module attributes {stable_mosaic.version = 11 : i64} {
  func.func @kernel(%arg0: i32, %arg1: i32, %arg2: memref<1x4x128xf32, #tpu.memory_space<vmem>>, %arg3: memref<32x4xf32, #tpu.memory_space<vmem>>, %arg4: memref<32x1xf32, #tpu.memory_space<vmem>>, %arg5: memref<32x8xf32, #tpu.memory_space<vmem>>, %arg6: memref<1x8xf32, #tpu.memory_space<vmem>>, %arg7: memref<1x1xf32, #tpu.memory_space<smem>>, %arg8: memref<8x128xf32, #tpu.memory_space<vmem>>, %arg9: memref<1x128xf32, #tpu.memory_space<vmem>>, %arg10: memref<1x8x128xf32, #tpu.memory_space<vmem>>, %arg11: memref<1x32xf32, #tpu.memory_space<vmem>>) attributes {dimension_semantics = [#tpu.dimension_semantics<parallel>, #tpu.dimension_semantics<arbitrary>], iteration_bounds = array<i64: 2, 2>, scalar_prefetch = 0 : i64, scratch_operands = 1 : i64, tpu.core_type = #tpu.core_type<tc>, window_params = [{transform_indices = @transform_0, window_bounds = array<i64: 1, 4, 128>}, {pipeline_mode = #tpu.pipeline_mode<synchronous>, transform_indices = @transform_1, window_bounds = array<i64: 32, 4>}, {pipeline_mode = #tpu.pipeline_mode<synchronous>, transform_indices = @transform_2, window_bounds = array<i64: 32, 1>}, {pipeline_mode = #tpu.pipeline_mode<synchronous>, transform_indices = @transform_3, window_bounds = array<i64: 32, 8>}, {pipeline_mode = #tpu.pipeline_mode<synchronous>, transform_indices = @transform_4, window_bounds = array<i64: 1, 8>}, {transform_indices = @transform_5, window_bounds = array<i64: 1, 1>}, {pipeline_mode = #tpu.pipeline_mode<synchronous>, transform_indices = @transform_6, window_bounds = array<i64: 8, 128>}, {pipeline_mode = #tpu.pipeline_mode<synchronous>, transform_indices = @transform_7, window_bounds = array<i64: 1, 128>}, {transform_indices = @transform_8, window_bounds = array<i64: 1, 8, 128>}]} {
    %c0_i32 = arith.constant 0 : i32
    %0 = arith.cmpi eq, %arg1, %c0_i32 : i32
    %1 = arith.extui %0 : i1 to i32
    %c0_i32_0 = arith.constant 0 : i32
    %2 = arith.cmpi ne, %1, %c0_i32_0 : i32
    scf.if %2 {
      %cst_15 = arith.constant 0.000000e+00 : f32
      %20 = vector.broadcast %cst_15 : f32 to vector<1x32xf32>
      %c0_16 = arith.constant 0 : index
      %c0_17 = arith.constant 0 : index
      %21 = vector.load %arg11[%c0_16, %c0_17] : memref<1x32xf32, #tpu.memory_space<vmem>>, vector<1x32xf32>
      tpu.vector_store %arg11[%c0_16, %c0_17], %20 {strides = array<i32>} : memref<1x32xf32, #tpu.memory_space<vmem>>, vector<1x32xf32>,
    } else {
    }
    %c0 = arith.constant 0 : index
    %c0_1 = arith.constant 0 : index
    %c0_2 = arith.constant 0 : index
    %3 = vector.load %arg2[%c0, %c0_1, %c0_2] : memref<1x4x128xf32, #tpu.memory_space<vmem>>, vector<1x4x128xf32>
    %4 = vector.shape_cast %3 : vector<1x4x128xf32> to vector<4x128xf32>
    %c0_3 = arith.constant 0 : index
    %c0_4 = arith.constant 0 : index
    %5 = vector.load %arg3[%c0_3, %c0_4] : memref<32x4xf32, #tpu.memory_space<vmem>>, vector<32x4xf32>
    %cst = arith.constant dense<0.000000e+00> : vector<32x128xf32>
    %6 = tpu.matmul %5, %4, %cst {dimension_numbers = #tpu.dot_dimension_numbers<[1], [0], [0], [1], [0, 0, 1, 1], [], []>} : vector<32x4xf32>, vector<4x128xf32>, vector<32x128xf32> -> vector<32x128xf32>
    %c0_5 = arith.constant 0 : index
    %c0_6 = arith.constant 0 : index
    %7 = vector.load %arg4[%c0_5, %c0_6] : memref<32x1xf32, #tpu.memory_space<vmem>>, vector<32x1xf32>
    %8 = vector.broadcast %7 : vector<32x1xf32> to vector<32x128xf32>
    %9 = arith.addf %6, %8 : vector<32x128xf32>
    %cst_7 = arith.constant 0.000000e+00 : f32
    %10 = vector.broadcast %cst_7 : f32 to vector<32x128xf32>
    %11 = arith.maximumf %9, %10 : vector<32x128xf32>
    %cst_8 = arith.constant 3.906250e-03 : f32
    %12 = vector.broadcast %cst_8 : f32 to vector<1x128xf32>
    %c0_9 = arith.constant 0 : index
    %c0_10 = arith.constant 0 : index
    %13 = vector.load %arg11[%c0_9, %c0_10] : memref<1x32xf32, #tpu.memory_space<vmem>>, vector<1x32xf32>
    %cst_11 = arith.constant dense<0.000000e+00> : vector<1x32xf32>
    %14 = tpu.matmul %12, %11, %cst_11 {dimension_numbers = #tpu.dot_dimension_numbers<[1], [1], [0], [0], [0, 0, 1, 0], [], []>} : vector<1x128xf32>, vector<32x128xf32>, vector<1x32xf32> -> vector<1x32xf32>
    %15 = arith.addf %13, %14 : vector<1x32xf32>
    %c0_12 = arith.constant 0 : index
    %c0_13 = arith.constant 0 : index
    %16 = vector.load %arg11[%c0_12, %c0_13] : memref<1x32xf32, #tpu.memory_space<vmem>>, vector<1x32xf32>
    tpu.vector_store %arg11[%c0_12, %c0_13], %15 {strides = array<i32>} : memref<1x32xf32, #tpu.memory_space<vmem>>, vector<1x32xf32>,
    %c1_i32 = arith.constant 1 : i32
    %17 = arith.cmpi eq, %arg1, %c1_i32 : i32
    %18 = arith.extui %17 : i1 to i32
    %c0_i32_14 = arith.constant 0 : i32
    %19 = arith.cmpi ne, %18, %c0_i32_14 : i32
    scf.if %19 {
      %c0_15 = arith.constant 0 : index
      %c0_16 = arith.constant 0 : index
      %20 = vector.load %arg11[%c0_15, %c0_16] : memref<1x32xf32, #tpu.memory_space<vmem>>, vector<1x32xf32>
      %c0_17 = arith.constant 0 : index
      %c0_18 = arith.constant 0 : index
      %21 = vector.load %arg5[%c0_17, %c0_18] : memref<32x8xf32, #tpu.memory_space<vmem>>, vector<32x8xf32>
      %cst_19 = arith.constant dense<0.000000e+00> : vector<1x8xf32>
      %22 = tpu.matmul %20, %21, %cst_19 {dimension_numbers = #tpu.dot_dimension_numbers<[1], [0], [0], [1], [0, 0, 1, 1], [], []>} : vector<1x32xf32>, vector<32x8xf32>, vector<1x8xf32> -> vector<1x8xf32>
      %c0_20 = arith.constant 0 : index
      %c0_21 = arith.constant 0 : index
      %23 = vector.load %arg6[%c0_20, %c0_21] : memref<1x8xf32, #tpu.memory_space<vmem>>, vector<1x8xf32>
      %24 = arith.addf %22, %23 : vector<1x8xf32>
      %c0_22 = arith.constant 0 : index
      %c0_23 = arith.constant 0 : index
      %25 = memref.load %arg7[%c0_22, %c0_23] : memref<1x1xf32, #tpu.memory_space<smem>>
      %cst_24 = arith.constant 0.000000e+00 : f32
      %26 = vector.broadcast %cst_24 : f32 to vector<1x8xf32>
      %27 = arith.cmpf oge, %24, %26 : vector<1x8xf32>
      %28 = vector.broadcast %25 : f32 to vector<1x8xf32>
      %29 = arith.mulf %28, %24 : vector<1x8xf32>
      %30 = arith.select %27, %24, %29 : vector<1x8xi1>, vector<1x8xf32>
      %c0_25 = arith.constant 0 : index
      %c0_26 = arith.constant 0 : index
      %31 = vector.load %arg8[%c0_25, %c0_26] : memref<8x128xf32, #tpu.memory_space<vmem>>, vector<8x128xf32>
      %cst_27 = arith.constant dense<0.000000e+00> : vector<1x128xf32>
      %32 = tpu.matmul %30, %31, %cst_27 {dimension_numbers = #tpu.dot_dimension_numbers<[1], [0], [0], [1], [0, 0, 1, 1], [], []>} : vector<1x8xf32>, vector<8x128xf32>, vector<1x128xf32> -> vector<1x128xf32>
      %c0_28 = arith.constant 0 : index
      %c0_29 = arith.constant 0 : index
      %33 = vector.load %arg9[%c0_28, %c0_29] : memref<1x128xf32, #tpu.memory_space<vmem>>, vector<1x128xf32>
      %34 = arith.addf %32, %33 : vector<1x128xf32>
      %35 = vector.shape_cast %34 : vector<1x128xf32> to vector<1x1x128xf32>
      %36 = vector.shape_cast %35 : vector<1x1x128xf32> to vector<1x1x128xf32>
      %37 = vector.broadcast %36 : vector<1x1x128xf32> to vector<1x8x128xf32>
      %c0_30 = arith.constant 0 : index
      %c0_31 = arith.constant 0 : index
      %c0_32 = arith.constant 0 : index
      %38 = vector.load %arg10[%c0_30, %c0_31, %c0_32] : memref<1x8x128xf32, #tpu.memory_space<vmem>>, vector<1x8x128xf32>
      tpu.vector_store %arg10[%c0_30, %c0_31, %c0_32], %37 {strides = array<i32>} : memref<1x8x128xf32, #tpu.memory_space<vmem>>, vector<1x8x128xf32>,
    } else {
    }
    return
  }
  func.func @transform_0(%arg0: i32, %arg1: i32) -> (i32, i32, i32) {
    %c0_i32 = arith.constant 0 : i32
    %c0_i32_0 = arith.constant 0 : i32
    return %arg0, %c0_i32, %arg1 : i32, i32, i32
  }
  func.func @transform_1(%arg0: i32, %arg1: i32) -> (i32, i32) {
    %c0_i32 = arith.constant 0 : i32
    %c0_i32_0 = arith.constant 0 : i32
    %c0_i32_1 = arith.constant 0 : i32
    return %c0_i32, %c0_i32_0 : i32, i32
  }
  func.func @transform_2(%arg0: i32, %arg1: i32) -> (i32, i32) {
    %c0_i32 = arith.constant 0 : i32
    %c0_i32_0 = arith.constant 0 : i32
    %c0_i32_1 = arith.constant 0 : i32
    return %c0_i32, %c0_i32_0 : i32, i32
  }
  func.func @transform_3(%arg0: i32, %arg1: i32) -> (i32, i32) {
    %c0_i32 = arith.constant 0 : i32
    %c0_i32_0 = arith.constant 0 : i32
    %c0_i32_1 = arith.constant 0 : i32
    return %c0_i32, %c0_i32_0 : i32, i32
  }
  func.func @transform_4(%arg0: i32, %arg1: i32) -> (i32, i32) {
    %c0_i32 = arith.constant 0 : i32
    %c0_i32_0 = arith.constant 0 : i32
    %c0_i32_1 = arith.constant 0 : i32
    return %c0_i32, %c0_i32_0 : i32, i32
  }
  func.func @transform_5(%arg0: i32, %arg1: i32) -> (i32, i32) {
    %c0_i32 = arith.constant 0 : i32
    %c0_i32_0 = arith.constant 0 : i32
    %c0_i32_1 = arith.constant 0 : i32
    return %c0_i32, %c0_i32_0 : i32, i32
  }
  func.func @transform_6(%arg0: i32, %arg1: i32) -> (i32, i32) {
    %c0_i32 = arith.constant 0 : i32
    %c0_i32_0 = arith.constant 0 : i32
    %c0_i32_1 = arith.constant 0 : i32
    return %c0_i32, %c0_i32_0 : i32, i32
  }
  func.func @transform_7(%arg0: i32, %arg1: i32) -> (i32, i32) {
    %c0_i32 = arith.constant 0 : i32
    %c0_i32_0 = arith.constant 0 : i32
    %c0_i32_1 = arith.constant 0 : i32
    return %c0_i32, %c0_i32_0 : i32, i32
  }
  func.func @transform_8(%arg0: i32, %arg1: i32) -> (i32, i32, i32) {
    %c0_i32 = arith.constant 0 : i32
    %c0_i32_0 = arith.constant 0 : i32
    %c0_i32_1 = arith.constant 0 : i32
    return %arg0, %c0_i32, %c0_i32_0 : i32, i32, i32
  }
}

</mosaic_0001>

<llo_original>
// kernel: embedding_model_forward.1
$region0: #{embedding_model_forward.1}
  #allocation0 [shape = 'u32[]', space=smem, size = 0x4, offset = 0x4, fixed_abs, tag = 'smem constant byte address 0x4 - core index']
  #allocation1 [shape = 'u32[144,128]{1,0:T(1,128)}', space=vmem, size = 0x12000, scoped, tag = 'internal scratch']
  #allocation2 [shape = 'f32[1,32]{1,0:T(1,128)}', space=vmem, size = 0x200, scoped, tag = 'scratch operand']
  #allocation3 [shape = 'f32[1,1]{1,0:T(1,128)S(6)}', space=smem, size = 0x200, scoped, tag = 'scoped memory for embedding_model_forward.1']
  %s0 = inlined_call_operand.vmem [shape: f32[2,4,256], index: 0, kind: input, shape index: {}]
  %s1 = inlined_call_operand.vmem [shape: f32[32,4], index: 1, kind: input, shape index: {}]
  %s2 = inlined_call_operand.vmem [shape: f32[32,1], index: 2, kind: input, shape index: {}]
  %s3 = inlined_call_operand.vmem [shape: f32[32,8], index: 3, kind: input, shape index: {}]
  %s4 = inlined_call_operand.vmem [shape: f32[1,8], index: 4, kind: input, shape index: {}]
  %s5 = inlined_call_operand.<no memory space> [shape: f32[1,1], index: 5, kind: input, shape index: {}]
  %s6 = inlined_call_operand.vmem [shape: f32[8,128], index: 6, kind: input, shape index: {}]
  %s7 = inlined_call_operand.vmem [shape: f32[1,128], index: 7, kind: input, shape index: {}]
  %s8 = inlined_call_operand.vmem [shape: f32[2,8,128], index: 8, kind: output, shape index: {}]
  %s9 = sld [smem:[#allocation0]]
  $region73: #{embedding_model_forward.1} parent=0
    _
  %s11 = ssub.s32 1, %s9
  %s12 = scalar_select 0, %s11, %s9
  %13 = sst [smem:[#allocation3]] %s5
  loop: start=0, step=1, limit=6
  $region2: #{embedding_model_forward.1} parent=0 // loop_pre_header
    _
  $region3: #{embedding_model_forward.1} parent=0 // loop_header
    %s15 = sphi 0, %s19
    %p16 = scmp.ge.s32.totalorder %s15, 6
    %s22 = sphi 0, %s34
    %s23 = sphi 0, %s30
    %s24 = sphi 0, %s22
    %s25 = sphi 0, %s23
    %s26 = sphi 0, %s24
    %s27 = sphi 0, %s25
    %s39 = sphi 0, %s41
    %s42 = sphi 0, %s39
    %s43 = sphi 0, %s42
    %s59 = sphi 0, %s43
    %s63 = sphi 0, %s63
    %s65 = sphi 0, %s63
    %s66 = sphi 0, %s65
    %s80 = sphi 0, %s66
    %s84 = sphi 0, %s84
    %s86 = sphi 0, %s84
    %s87 = sphi 0, %s86
    %s101 = sphi 0, %s87
    %s105 = sphi 0, %s105
    %s107 = sphi 0, %s105
    %s108 = sphi 0, %s107
    %s122 = sphi 0, %s108
    %s126 = sphi 0, %s126
    %s128 = sphi 0, %s126
    %s129 = sphi 0, %s128
    %s143 = sphi 0, %s129
    %s147 = sphi 0, %s147
    %s149 = sphi 0, %s147
    %s150 = sphi 0, %s149
    %s164 = sphi 0, %s150
    %s168 = sphi 0, %s168
    %s170 = sphi 0, %s168
    %s171 = sphi 0, %s170
    %s185 = sphi 0, %s171
    %s189 = sphi 0, %s189
    %s191 = sphi 0, %s189
    %s192 = sphi 0, %s191
    %s206 = sphi 0, %s192
    %s212 = sphi 0, %s214
    %s215 = sphi 0, %s212
    %s216 = sphi 0, %s215
    %s232 = sphi 0, %s216
  $region4: #{embedding_model_forward.1} parent=0 // loop_header_branch
    %18 = sbr.rel (%p16) target = $region8
  $region5: #{embedding_model_forward.1} parent=0 // loop_body
    %s20 = ssub.s32 %s15, 1
    %s21 = ssub.s32 %s15, 2
    %s28 = sadd.s32 1, %s23
    %p29 = scmp.ge.s32.totalorder %s28, 2
    %s30 = scalar_select %p29, 0, %s28
    %s31 = sadd.s32 1, %s22
    %s32 = scalar_select %p29, %s31, %s22
    %p33 = scmp.ge.s32.totalorder %s32, 2
    %s34 = scalar_select %p33, 0, %s32
    %s35 = ssub.s32 %s22, %s34
    %s36 = ssub.s32 %s23, %s30
    %s37 = sor.u32 %s35, %s36
    %p38 = scmp.eq.s32.totalorder %s37, 0
    %s40 = sadd.s32 %s39, 1
    %s41 = scalar_select %p38, %s39, %s40
    %p44 = pneg %p38
    %p45 = scmp.eq.s32.totalorder %s15, 3
    %p46 = por %p44, %p45
    %p47 = scmp.ne.s32.totalorder %s39, %s42
    %p48 = scmp.eq.s32.totalorder %s15, 0
    %p49 = por %p47, %p48
    %p50 = scmp.ne.s32.totalorder %s39, %s42
    %p51 = scmp.eq.s32.totalorder %s20, 3
    %p52 = por %p50, %p51
    %p53 = scmp.ne.s32.totalorder %s42, %s43
    %p54 = scmp.eq.s32.totalorder %s20, 0
    %p55 = por %p53, %p54
    %p56 = scmp.ne.s32.totalorder %s42, %s43
    %p57 = scmp.eq.s32.totalorder %s21, 3
    %p58 = por %p56, %p57
    %p60 = scmp.ne.s32.totalorder %s43, %s59
    %p61 = scmp.eq.s32.totalorder %s21, 0
    %p62 = por %p60, %p61
    %s64 = sadd.s32 %s63, 1
    %p67 = scmp.eq.s32.totalorder %s15, 3
    %p68 = scmp.ne.s32.totalorder %s63, %s65
    %p69 = scmp.eq.s32.totalorder %s15, 0
    %p70 = por %p68, %p69
    %p71 = scmp.ne.s32.totalorder %s63, %s65
    %p72 = scmp.eq.s32.totalorder %s20, 3
    %p73 = por %p71, %p72
    %p74 = scmp.ne.s32.totalorder %s65, %s66
    %p75 = scmp.eq.s32.totalorder %s20, 0
    %p76 = por %p74, %p75
    %p77 = scmp.ne.s32.totalorder %s65, %s66
    %p78 = scmp.eq.s32.totalorder %s21, 3
    %p79 = por %p77, %p78
    %p81 = scmp.ne.s32.totalorder %s66, %s80
    %p82 = scmp.eq.s32.totalorder %s21, 0
    %p83 = por %p81, %p82
    %s85 = sadd.s32 %s84, 1
    %p88 = scmp.eq.s32.totalorder %s15, 3
    %p89 = scmp.ne.s32.totalorder %s84, %s86
    %p90 = scmp.eq.s32.totalorder %s15, 0
    %p91 = por %p89, %p90
    %p92 = scmp.ne.s32.totalorder %s84, %s86
    %p93 = scmp.eq.s32.totalorder %s20, 3
    %p94 = por %p92, %p93
    %p95 = scmp.ne.s32.totalorder %s86, %s87
    %p96 = scmp.eq.s32.totalorder %s20, 0
    %p97 = por %p95, %p96
    %p98 = scmp.ne.s32.totalorder %s86, %s87
    %p99 = scmp.eq.s32.totalorder %s21, 3
    %p100 = por %p98, %p99
    %p102 = scmp.ne.s32.totalorder %s87, %s101
    %p103 = scmp.eq.s32.totalorder %s21, 0
    %p104 = por %p102, %p103
    %s106 = sadd.s32 %s105, 1
    %p109 = scmp.eq.s32.totalorder %s15, 3
    %p110 = scmp.ne.s32.totalorder %s105, %s107
    %p111 = scmp.eq.s32.totalorder %s15, 0
    %p112 = por %p110, %p111
    %p113 = scmp.ne.s32.totalorder %s105, %s107
    %p114 = scmp.eq.s32.totalorder %s20, 3
    %p115 = por %p113, %p114
    %p116 = scmp.ne.s32.totalorder %s107, %s108
    %p117 = scmp.eq.s32.totalorder %s20, 0
    %p118 = por %p116, %p117
    %p119 = scmp.ne.s32.totalorder %s107, %s108
    %p120 = scmp.eq.s32.totalorder %s21, 3
    %p121 = por %p119, %p120
    %p123 = scmp.ne.s32.totalorder %s108, %s122
    %p124 = scmp.eq.s32.totalorder %s21, 0
    %p125 = por %p123, %p124
    %s127 = sadd.s32 %s126, 1
    %p130 = scmp.eq.s32.totalorder %s15, 3
    %p131 = scmp.ne.s32.totalorder %s126, %s128
    %p132 = scmp.eq.s32.totalorder %s15, 0
    %p133 = por %p131, %p132
    %p134 = scmp.ne.s32.totalorder %s126, %s128
    %p135 = scmp.eq.s32.totalorder %s20, 3
    %p136 = por %p134, %p135
    %p137 = scmp.ne.s32.totalorder %s128, %s129
    %p138 = scmp.eq.s32.totalorder %s20, 0
    %p139 = por %p137, %p138
    %p140 = scmp.ne.s32.totalorder %s128, %s129
    %p141 = scmp.eq.s32.totalorder %s21, 3
    %p142 = por %p140, %p141
    %p144 = scmp.ne.s32.totalorder %s129, %s143
    %p145 = scmp.eq.s32.totalorder %s21, 0
    %p146 = por %p144, %p145
    %s148 = sadd.s32 %s147, 1
    %p151 = scmp.eq.s32.totalorder %s15, 3
    %p152 = scmp.ne.s32.totalorder %s147, %s149
    %p153 = scmp.eq.s32.totalorder %s15, 0
    %p154 = por %p152, %p153
    %p155 = scmp.ne.s32.totalorder %s147, %s149
    %p156 = scmp.eq.s32.totalorder %s20, 3
    %p157 = por %p155, %p156
    %p158 = scmp.ne.s32.totalorder %s149, %s150
    %p159 = scmp.eq.s32.totalorder %s20, 0
    %p160 = por %p158, %p159
    %p161 = scmp.ne.s32.totalorder %s149, %s150
    %p162 = scmp.eq.s32.totalorder %s21, 3
    %p163 = por %p161, %p162
    %p165 = scmp.ne.s32.totalorder %s150, %s164
    %p166 = scmp.eq.s32.totalorder %s21, 0
    %p167 = por %p165, %p166
    %s169 = sadd.s32 %s168, 1
    %p172 = scmp.eq.s32.totalorder %s15, 3
    %p173 = scmp.ne.s32.totalorder %s168, %s170
    %p174 = scmp.eq.s32.totalorder %s15, 0
    %p175 = por %p173, %p174
    %p176 = scmp.ne.s32.totalorder %s168, %s170
    %p177 = scmp.eq.s32.totalorder %s20, 3
    %p178 = por %p176, %p177
    %p179 = scmp.ne.s32.totalorder %s170, %s171
    %p180 = scmp.eq.s32.totalorder %s20, 0
    %p181 = por %p179, %p180
    %p182 = scmp.ne.s32.totalorder %s170, %s171
    %p183 = scmp.eq.s32.totalorder %s21, 3
    %p184 = por %p182, %p183
    %p186 = scmp.ne.s32.totalorder %s171, %s185
    %p187 = scmp.eq.s32.totalorder %s21, 0
    %p188 = por %p186, %p187
    %s190 = sadd.s32 %s189, 1
    %p193 = scmp.eq.s32.totalorder %s15, 3
    %p194 = scmp.ne.s32.totalorder %s189, %s191
    %p195 = scmp.eq.s32.totalorder %s15, 0
    %p196 = por %p194, %p195
    %p197 = scmp.ne.s32.totalorder %s189, %s191
    %p198 = scmp.eq.s32.totalorder %s20, 3
    %p199 = por %p197, %p198
    %p200 = scmp.ne.s32.totalorder %s191, %s192
    %p201 = scmp.eq.s32.totalorder %s20, 0
    %p202 = por %p200, %p201
    %p203 = scmp.ne.s32.totalorder %s191, %s192
    %p204 = scmp.eq.s32.totalorder %s21, 3
    %p205 = por %p203, %p204
    %p207 = scmp.ne.s32.totalorder %s192, %s206
    %p208 = scmp.eq.s32.totalorder %s21, 0
    %p209 = por %p207, %p208
    %s210 = ssub.s32 %s22, %s34
    %p211 = scmp.eq.s32.totalorder %s210, 0
    %s213 = sadd.s32 %s212, 1
    %s214 = scalar_select %p211, %s212, %s213
    %p217 = pneg %p211
    %p218 = scmp.eq.s32.totalorder %s15, 3
    %p219 = por %p217, %p218
    %p220 = scmp.ne.s32.totalorder %s212, %s215
    %p221 = scmp.eq.s32.totalorder %s15, 0
    %p222 = por %p220, %p221
    %p223 = scmp.ne.s32.totalorder %s212, %s215
    %p224 = scmp.eq.s32.totalorder %s20, 3
    %p225 = por %p223, %p224
    %p226 = scmp.ne.s32.totalorder %s215, %s216
    %p227 = scmp.eq.s32.totalorder %s20, 0
    %p228 = por %p226, %p227
    %p229 = scmp.ne.s32.totalorder %s215, %s216
    %p230 = scmp.eq.s32.totalorder %s21, 3
    %p231 = por %p229, %p230
    %p233 = scmp.ne.s32.totalorder %s216, %s232
    %p234 = scmp.eq.s32.totalorder %s21, 0
    %p235 = por %p233, %p234
    %p236 = scmp.le.s32.totalorder 1, %s15
    %p237 = scmp.lt.s32.totalorder %s15, 5
    %p238 = pnand %p236, %p237
    %p239 = pneg %p238
    // Predicated region
    $region9: #{embedding_model_forward.1} parent=5 // pred_check
      _
    $region10: #{embedding_model_forward.1} parent=5 // pred_check_branch
      %241 = sbr.rel (%p238) target = $region12
    $region11: #{embedding_model_forward.1} parent=5 // pred_region
      %s242 = ssub.s32 %s15, 1
      // Predicated region
      $region13: #{embedding_model_forward.1} parent=11 // pred_check
        %p243 = pneg %p76
      $region14: #{embedding_model_forward.1} parent=11 // pred_check_branch
        %245 = sbr.rel (%p243) target = $region16
      $region15: #{embedding_model_forward.1} parent=11 // pred_region
        _
      $region16: #{embedding_model_forward.1} parent=11 // pred_fallthru
        _
      // Predicated region
      $region17: #{embedding_model_forward.1} parent=11 // pred_check
        %p246 = pneg %p97
      $region18: #{embedding_model_forward.1} parent=11 // pred_check_branch
        %248 = sbr.rel (%p246) target = $region20
      $region19: #{embedding_model_forward.1} parent=11 // pred_region
        _
      $region20: #{embedding_model_forward.1} parent=11 // pred_fallthru
        _
      // Predicated region
      $region21: #{embedding_model_forward.1} parent=11 // pred_check
        %p249 = pneg %p118
      $region22: #{embedding_model_forward.1} parent=11 // pred_check_branch
        %251 = sbr.rel (%p249) target = $region24
      $region23: #{embedding_model_forward.1} parent=11 // pred_region
        _
      $region24: #{embedding_model_forward.1} parent=11 // pred_fallthru
        _
      // Predicated region
      $region25: #{embedding_model_forward.1} parent=11 // pred_check
        %p252 = pneg %p139
      $region26: #{embedding_model_forward.1} parent=11 // pred_check_branch
        %254 = sbr.rel (%p252) target = $region28
      $region27: #{embedding_model_forward.1} parent=11 // pred_region
        _
      $region28: #{embedding_model_forward.1} parent=11 // pred_fallthru
        _
      // Predicated region
      $region29: #{embedding_model_forward.1} parent=11 // pred_check
        %p255 = pneg %p160
      $region30: #{embedding_model_forward.1} parent=11 // pred_check_branch
        %257 = sbr.rel (%p255) target = $region32
      $region31: #{embedding_model_forward.1} parent=11 // pred_region
        _
      $region32: #{embedding_model_forward.1} parent=11 // pred_fallthru
        _
      // Predicated region
      $region33: #{embedding_model_forward.1} parent=11 // pred_check
        %p258 = pneg %p181
      $region34: #{embedding_model_forward.1} parent=11 // pred_check_branch
        %260 = sbr.rel (%p258) target = $region36
      $region35: #{embedding_model_forward.1} parent=11 // pred_region
        _
      $region36: #{embedding_model_forward.1} parent=11 // pred_fallthru
        _
      // Predicated region
      $region37: #{embedding_model_forward.1} parent=11 // pred_check
        %p261 = pneg %p202
      $region38: #{embedding_model_forward.1} parent=11 // pred_check_branch
        %263 = sbr.rel (%p261) target = $region40
      $region39: #{embedding_model_forward.1} parent=11 // pred_region
        _
      $region40: #{embedding_model_forward.1} parent=11 // pred_fallthru
        _
    $region12: #{embedding_model_forward.1} parent=5 // pred_fallthru
      _
    %p264 = scmp.lt.s32.totalorder %s15, 4
    // Predicated region
    $region41: #{embedding_model_forward.1} parent=5 // pred_check
      %p265 = pneg %p264
    $region42: #{embedding_model_forward.1} parent=5 // pred_check_branch
      %267 = sbr.rel (%p265) target = $region44
    $region43: #{embedding_model_forward.1} parent=5 // pred_region
      // Predicated region
      $region45: #{embedding_model_forward.1} parent=43 // pred_check
        %p268 = pneg %p49
      $region46: #{embedding_model_forward.1} parent=43 // pred_check_branch
        %270 = sbr.rel (%p268) target = $region48
      $region47: #{embedding_model_forward.1} parent=43 // pred_region
        %p271 = scmp.lt.s32.totalorder %s22, 1
        %s272 = scalar_select %p271, %s22, 1
        %p273 = scmp.lt.s32.totalorder %s23, 1
        %s274 = scalar_select %p273, %s23, 1
        %s275 = smul.addr %s272, 2
        %s276 = sadd.s32 %s274, %s275
        %s277 = smul.addr %s276, 4
        %s278 = scalar_lea.vmem %s0, %s277
      $region48: #{embedding_model_forward.1} parent=43 // pred_fallthru
        _
    $region44: #{embedding_model_forward.1} parent=5 // pred_fallthru
      _
    %p279 = scmp.le.s32.totalorder 1, %s15
    %p280 = scmp.lt.s32.totalorder %s15, 5
    %p281 = pnand %p279, %p280
    %p282 = pneg %p281
    // Predicated region
    $region49: #{embedding_model_forward.1} parent=5 // pred_check
      _
    $region50: #{embedding_model_forward.1} parent=5 // pred_check_branch
      %284 = sbr.rel (%p281) target = $region52
    $region51: #{embedding_model_forward.1} parent=5 // pred_region
      %s285 = ssub.s32 %s15, 1
      %p286 = scmp.lt.s32.totalorder %s24, 1
      %s287 = scalar_select %p286, %s24, 1
      %p288 = scmp.lt.s32.totalorder %s25, 1
      %s289 = scalar_select %p288, %s25, 1
      %s290 = smul.addr %s287, 2
      %s291 = sadd.s32 %s289, %s290
      %s292 = smul.addr %s291, 4
      %s293 = scalar_lea.vmem %s0, %s292
      %p294 = pneg %p55
      %p295 = pneg %p52
      %p296 = pneg %p76
      %p297 = pneg %p73
      %p298 = pneg %p97
      %p299 = pneg %p94
      %p300 = pneg %p118
      %p301 = pneg %p115
      %p302 = pneg %p139
      %p303 = pneg %p136
      %p304 = pneg %p160
      %p305 = pneg %p157
      %p306 = pneg %p181
      %p307 = pneg %p178
      %p308 = pneg %p202
      %p309 = pneg %p199
      %p310 = pneg %p228
      %p311 = pneg %p225
      %p312 = scmp.lt.s32.totalorder %s24, 1
      %s313 = scalar_select %p312, %s24, 1
      %s314 = smul.addr %s313, 8
      %s315 = scalar_lea.vmem %s8, %s314
      %p316 = scmp.lt.s32.totalorder %s24, 1
      %s317 = scalar_select %p316, %s24, 1
      %p318 = scmp.lt.s32.totalorder %s25, 1
      %s319 = scalar_select %p318, %s25, 1
      %s320 = smul.addr %s317, 2
      %s321 = sadd.s32 %s319, %s320
      %s322 = smul.addr %s321, 4
      %s323 = scalar_lea.vmem %s0, %s322
      %p324 = scmp.lt.s32.totalorder %s24, 1
      %s325 = scalar_select %p324, %s24, 1
      %s326 = smul.addr %s325, 8
      %s327 = scalar_lea.vmem %s8, %s326
      %p328 = scmp.eq.s32.totalorder %s25, 0
      // Predicated region
      $region53: #{embedding_model_forward.1} parent=51 // pred_check
        %p329 = pneg %p328
      $region54: #{embedding_model_forward.1} parent=51 // pred_check_branch
        %331 = sbr.rel (%p329) target = $region56
      $region55: #{embedding_model_forward.1} parent=51 // pred_region
        %vm332 = vcmask 253952
        %333 = vst.msk [vmem:[#allocation2] sm:$0x1] %vm332, 0.0
      $region56: #{embedding_model_forward.1} parent=51 // pred_fallthru
        _
      %v334 = vld [vmem:[%s323] sm:$0xf]
      %v335 = vld [vmem:[%s1] sm:$0xff]
      %v336 = vld [vmem:[%s1 + $0x8] sm:$0xff]
      %v337 = vld [vmem:[%s1 + $0x10] sm:$0xff]
      %v338 = vld [vmem:[%s1 + $0x18] sm:$0xff]
      %v339 = vld [vmem:[%s2] sm:$0xff]
      %v340 = vld [vmem:[%s2 + $0x8] sm:$0xff]
      %v341 = vld [vmem:[%s2 + $0x10] sm:$0xff]
      %v342 = vld [vmem:[%s2 + $0x18] sm:$0xff]
      %344 = vset.pattern.permute.xlu0 0
      %345 = vperm.xlu0 %344, %v339
      %v346 = vpop.permute.xlu0 %345
      %349 = vset.pattern.permute.xlu0 0
      %350 = vperm.xlu0 %349, %v340
      %v351 = vpop.permute.xlu0 %350
      %354 = vset.pattern.permute.xlu0 0
      %355 = vperm.xlu0 %354, %v341
      %v356 = vpop.permute.xlu0 %355
      %359 = vset.pattern.permute.xlu0 0
      %360 = vperm.xlu0 %359, %v342
      %v361 = vpop.permute.xlu0 %360
      %vm363 = vcmask 31744
      %v365 = vsel %vm363, %v335, 0
      %v368 = vsel %vm363, %v336, 0
      %v371 = vsel %vm363, %v337, 0
      %v374 = vsel %vm363, %v338, 0
      %vm376 = vcmask 1043456
      %v378 = vsel %vm376, %v334, 0
      %380 = vmatprep.subr.mxu0 0.0
      %381 = vmatpush1.msra.mxu0 %v378
      %382 = vmatprep.subr.mxu0 0.0
      %383 = vmatpush1.msra.mxu0 0.0
      %384 = vmatprep.subr.mxu0 0.0
      %385 = vmatpush1.msra.mxu0 0.0
      %386 = vmatprep.subr.mxu0 0.0
      %387 = vmatpush1.msra.mxu0 0.0
      %388 = vmatprep.subr.mxu0 0.0
      %389 = vmatpush1.msra.mxu0 0.0
      %390 = vmatprep.subr.mxu0 0.0
      %391 = vmatpush1.msra.mxu0 0.0
      %392 = vmatprep.subr.mxu0 0.0
      %393 = vmatpush1.msra.mxu0 0.0
      %394 = vmatprep.subr.mxu0 0.0
      %395 = vmatpush1.msra.mxu0 0.0
      %396 = vmatprep.subr.mxu0 0.0
      %397 = vmatpush1.msra.mxu0 0.0
      %398 = vmatprep.subr.mxu0 0.0
      %399 = vmatpush1.msra.mxu0 0.0
      %400 = vmatprep.subr.mxu0 0.0
      %401 = vmatpush1.msra.mxu0 0.0
      %402 = vmatprep.subr.mxu0 0.0
      %403 = vmatpush1.msra.mxu0 0.0
      %404 = vmatprep.subr.mxu0 0.0
      %405 = vmatpush1.msra.mxu0 0.0
      %406 = vmatprep.subr.mxu0 0.0
      %407 = vmatpush1.msra.mxu0 0.0
      %408 = vmatprep.subr.mxu0 0.0
      %409 = vmatpush1.msra.mxu0 0.0
      %410 = vmatprep.subr.mxu0 0.0
      %411 = vmatpush1.msra.mxu0 0.0
      %412 = vmatprep.subr.mxu0 0.0
      %413 = vmatpush1.msra.mxu0 0.0
      %414 = vmatprep.subr.mxu0 0.0
      %415 = vmatpush1.msra.mxu0 0.0
      %416 = vmatprep.subr.mxu0 0.0
      %417 = vmatpush1.msra.mxu0 0.0
      %418 = vmatprep.subr.mxu0 0.0
      %419 = vmatpush1.msra.mxu0 0.0
      %420 = vmatprep.subr.mxu0 0.0
      %421 = vmatpush1.msra.mxu0 0.0
      %422 = vmatprep.subr.mxu0 0.0
      %423 = vmatpush1.msra.mxu0 0.0
      %424 = vmatprep.subr.mxu0 0.0
      %425 = vmatpush1.msra.mxu0 0.0
      %426 = vmatprep.subr.mxu0 0.0
      %427 = vmatpush1.msra.mxu0 0.0
      %428 = vmatprep.subr.mxu0 0.0
      %429 = vmatpush1.msra.mxu0 0.0
      %430 = vmatprep.subr.mxu0 0.0
      %431 = vmatpush1.msra.mxu0 0.0
      %432 = vmatprep.subr.mxu0 0.0
      %433 = vmatpush1.msra.mxu0 0.0
      %434 = vmatprep.subr.mxu0 0.0
      %435 = vmatpush1.msra.mxu0 0.0
      %436 = vmatprep.subr.mxu0 0.0
      %437 = vmatpush1.msra.mxu0 0.0
      %438 = vmatprep.subr.mxu0 0.0
      %439 = vmatpush1.msra.mxu0 0.0
      %440 = vmatprep.subr.mxu0 0.0
      %441 = vmatpush1.msra.mxu0 0.0
      %442 = vmatprep.subr.mxu0 0.0
      %443 = vmatpush1.msra.mxu0 0.0
      %444 = vmatprep.mubr.f32.mxu0 0.0
      %445 = vmatmul.mubr.f32.gmra.mrb[0].mxu0 %v365
      %v446 = vpop.f32.mrb[0].mxu0
      %v447 = vadd.f32 %v346, %v446
      %v448 = vpop.f32.mrb[0].mxu0
      %449 = vmatprep.mubr.f32.mxu0 0.0
      %450 = vmatmul.mubr.f32.gmra.mrb[0].mxu0 %v368
      %v451 = vpop.f32.mrb[0].mxu0
      %v452 = vadd.f32 %v351, %v451
      %v453 = vpop.f32.mrb[0].mxu0
      %454 = vmatprep.mubr.f32.mxu0 0.0
      %455 = vmatmul.mubr.f32.gmra.mrb[0].mxu0 %v371
      %v456 = vpop.f32.mrb[0].mxu0
      %v457 = vadd.f32 %v356, %v456
      %v458 = vpop.f32.mrb[0].mxu0
      %459 = vmatprep.mubr.f32.mxu0 0.0
      %460 = vmatmul.mubr.f32.gmra.mrb[0].mxu0 %v374
      %v461 = vpop.f32.mrb[0].mxu0
      %v462 = vadd.f32 %v361, %v461
      %v463 = vpop.f32.mrb[0].mxu0
      %464 = vdwg.mxu0
      %v465 = vmax.f32 %v447, 0.0
      %v466 = vmax.f32 %v452, 0.0
      %v467 = vmax.f32 %v457, 0.0
      %v468 = vmax.f32 %v462, 0.0
      %v469 = vld [vmem:[#allocation2] sm:$0x1]
      %470 = vmatprep.subr.mxu0 0.0
      %471 = vmatpush1.xpose.msra.mxu0 %v465
      %472 = vmatprep.subr.mxu0 0.0
      %473 = vmatpush1.xpose.msra.mxu0 %v466
      %474 = vmatprep.subr.mxu0 0.0
      %475 = vmatpush1.xpose.msra.mxu0 %v467
      %476 = vmatprep.subr.mxu0 0.0
      %477 = vmatpush1.xpose.msra.mxu0 %v468
      %478 = vmatprep.subr.mxu0 0.0
      %479 = vmatpush1.xpose.msra.mxu0 0.0
      %480 = vmatprep.subr.mxu0 0.0
      %481 = vmatpush1.xpose.msra.mxu0 0.0
      %482 = vmatprep.subr.mxu0 0.0
      %483 = vmatpush1.xpose.msra.mxu0 0.0
      %484 = vmatprep.subr.mxu0 0.0
      %485 = vmatpush1.xpose.msra.mxu0 0.0
      %486 = vmatprep.subr.mxu0 0.0
      %487 = vmatpush1.xpose.msra.mxu0 0.0
      %488 = vmatprep.subr.mxu0 0.0
      %489 = vmatpush1.xpose.msra.mxu0 0.0
      %490 = vmatprep.subr.mxu0 0.0
      %491 = vmatpush1.xpose.msra.mxu0 0.0
      %492 = vmatprep.subr.mxu0 0.0
      %493 = vmatpush1.xpose.msra.mxu0 0.0
      %494 = vmatprep.subr.mxu0 0.0
      %495 = vmatpush1.xpose.msra.mxu0 0.0
      %496 = vmatprep.subr.mxu0 0.0
      %497 = vmatpush1.xpose.msra.mxu0 0.0
      %498 = vmatprep.subr.mxu0 0.0
      %499 = vmatpush1.xpose.msra.mxu0 0.0
      %500 = vmatprep.subr.mxu0 0.0
      %501 = vmatpush1.xpose.msra.mxu0 0.0
      %502 = vmatprep.subr.mxu0 0.0
      %503 = vmatpush1.xpose.msra.mxu0 0.0
      %504 = vmatprep.subr.mxu0 0.0
      %505 = vmatpush1.xpose.msra.mxu0 0.0
      %506 = vmatprep.subr.mxu0 0.0
      %507 = vmatpush1.xpose.msra.mxu0 0.0
      %508 = vmatprep.subr.mxu0 0.0
      %509 = vmatpush1.xpose.msra.mxu0 0.0
      %510 = vmatprep.subr.mxu0 0.0
      %511 = vmatpush1.xpose.msra.mxu0 0.0
      %512 = vmatprep.subr.mxu0 0.0
      %513 = vmatpush1.xpose.msra.mxu0 0.0
      %514 = vmatprep.subr.mxu0 0.0
      %515 = vmatpush1.xpose.msra.mxu0 0.0
      %516 = vmatprep.subr.mxu0 0.0
      %517 = vmatpush1.xpose.msra.mxu0 0.0
      %518 = vmatprep.subr.mxu0 0.0
      %519 = vmatpush1.xpose.msra.mxu0 0.0
      %520 = vmatprep.subr.mxu0 0.0
      %521 = vmatpush1.xpose.msra.mxu0 0.0
      %522 = vmatprep.subr.mxu0 0.0
      %523 = vmatpush1.xpose.msra.mxu0 0.0
      %524 = vmatprep.subr.mxu0 0.0
      %525 = vmatpush1.xpose.msra.mxu0 0.0
      %526 = vmatprep.subr.mxu0 0.0
      %527 = vmatpush1.xpose.msra.mxu0 0.0
      %528 = vmatprep.subr.mxu0 0.0
      %529 = vmatpush1.xpose.msra.mxu0 0.0
      %530 = vmatprep.subr.mxu0 0.0
      %531 = vmatpush1.xpose.msra.mxu0 0.0
      %532 = vmatprep.subr.mxu0 0.0
      %533 = vmatpush1.xpose.msra.mxu0 0.0
      %534 = vmatprep.mubr.f32.mxu0 0.0
      %535 = vmatmul.mubr.f32.gmra.mrb[0].mxu0 0.00390625
      %v536 = vpop.f32.mrb[0].mxu0
      %v537 = vadd.f32 0.0, %v536
      %v538 = vpop.f32.mrb[0].mxu0
      %539 = vdwg.mxu0
      %v540 = vadd.f32 %v469, %v537
      %vm541 = vcmask 253952
      %542 = vst.msk [vmem:[#allocation2] sm:$0x1] %vm541, %v540
      %p543 = scmp.eq.s32.totalorder %s25, 1
      // Predicated region
      $region57: #{embedding_model_forward.1} parent=51 // pred_check
        %p544 = pneg %p543
      $region58: #{embedding_model_forward.1} parent=51 // pred_check_branch
        %546 = sbr.rel (%p544) target = $region60
      $region59: #{embedding_model_forward.1} parent=51 // pred_region
        %v547 = vld [vmem:[#allocation2] sm:$0x1]
        %v548 = vld [vmem:[%s3] sm:$0xff]
        %v549 = vld [vmem:[%s3 + $0x8] sm:$0xff]
        %v550 = vld [vmem:[%s3 + $0x10] sm:$0xff]
        %v551 = vld [vmem:[%s3 + $0x18] sm:$0xff]
        %v552 = vld [vmem:[%s4] sm:$0x1]
        %vm553 = vcmask 261120
        %v555 = vsel %vm553, %v547, 0
        %557 = vmatprep.subr.mxu0 0.0
        %558 = vmatpush1.msra.mxu0 %v548
        %559 = vmatprep.subr.mxu0 0.0
        %560 = vmatpush1.msra.mxu0 %v549
        %561 = vmatprep.subr.mxu0 0.0
        %562 = vmatpush1.msra.mxu0 %v550
        %563 = vmatprep.subr.mxu0 0.0
        %564 = vmatpush1.msra.mxu0 %v551
        %565 = vmatprep.subr.mxu0 0.0
        %566 = vmatpush1.msra.mxu0 0.0
        %567 = vmatprep.subr.mxu0 0.0
        %568 = vmatpush1.msra.mxu0 0.0
        %569 = vmatprep.subr.mxu0 0.0
        %570 = vmatpush1.msra.mxu0 0.0
        %571 = vmatprep.subr.mxu0 0.0
        %572 = vmatpush1.msra.mxu0 0.0
        %573 = vmatprep.subr.mxu0 0.0
        %574 = vmatpush1.msra.mxu0 0.0
        %575 = vmatprep.subr.mxu0 0.0
        %576 = vmatpush1.msra.mxu0 0.0
        %577 = vmatprep.subr.mxu0 0.0
        %578 = vmatpush1.msra.mxu0 0.0
        %579 = vmatprep.subr.mxu0 0.0
        %580 = vmatpush1.msra.mxu0 0.0
        %581 = vmatprep.subr.mxu0 0.0
        %582 = vmatpush1.msra.mxu0 0.0
        %583 = vmatprep.subr.mxu0 0.0
        %584 = vmatpush1.msra.mxu0 0.0
        %585 = vmatprep.subr.mxu0 0.0
        %586 = vmatpush1.msra.mxu0 0.0
        %587 = vmatprep.subr.mxu0 0.0
        %588 = vmatpush1.msra.mxu0 0.0
        %589 = vmatprep.subr.mxu0 0.0
        %590 = vmatpush1.msra.mxu0 0.0
        %591 = vmatprep.subr.mxu0 0.0
        %592 = vmatpush1.msra.mxu0 0.0
        %593 = vmatprep.subr.mxu0 0.0
        %594 = vmatpush1.msra.mxu0 0.0
        %595 = vmatprep.subr.mxu0 0.0
        %596 = vmatpush1.msra.mxu0 0.0
        %597 = vmatprep.subr.mxu0 0.0
        %598 = vmatpush1.msra.mxu0 0.0
        %599 = vmatprep.subr.mxu0 0.0
        %600 = vmatpush1.msra.mxu0 0.0
        %601 = vmatprep.subr.mxu0 0.0
        %602 = vmatpush1.msra.mxu0 0.0
        %603 = vmatprep.subr.mxu0 0.0
        %604 = vmatpush1.msra.mxu0 0.0
        %605 = vmatprep.subr.mxu0 0.0
        %606 = vmatpush1.msra.mxu0 0.0
        %607 = vmatprep.subr.mxu0 0.0
        %608 = vmatpush1.msra.mxu0 0.0
        %609 = vmatprep.subr.mxu0 0.0
        %610 = vmatpush1.msra.mxu0 0.0
        %611 = vmatprep.subr.mxu0 0.0
        %612 = vmatpush1.msra.mxu0 0.0
        %613 = vmatprep.subr.mxu0 0.0
        %614 = vmatpush1.msra.mxu0 0.0
        %615 = vmatprep.subr.mxu0 0.0
        %616 = vmatpush1.msra.mxu0 0.0
        %617 = vmatprep.subr.mxu0 0.0
        %618 = vmatpush1.msra.mxu0 0.0
        %619 = vmatprep.subr.mxu0 0.0
        %620 = vmatpush1.msra.mxu0 0.0
        %621 = vmatprep.mubr.f32.mxu0 0.0
        %622 = vmatmul.mubr.f32.gmra.mrb[0].mxu0 %v555
        %v623 = vpop.f32.mrb[0].mxu0
        %v624 = vadd.f32 %v552, %v623
        %v625 = vpop.f32.mrb[0].mxu0
        %626 = vdwg.mxu0
        %s627 = sld [smem:[#allocation3]]
        %vm628 = vcmp.ge.f32.partialorder %v624, 0.0
        %v629 = vstv %s627
        %v630 = vmul.f32 %v629, %v624
        %v631 = vsel %vm628, %v624, %v630
        %v632 = vld [vmem:[%s6] sm:$0xff]
        %v633 = vld [vmem:[%s7] sm:$0x1]
        %vm634 = vcmask 64512
        %v636 = vsel %vm634, %v631, 0
        %638 = vmatprep.subr.mxu0 0.0
        %639 = vmatpush1.msra.mxu0 %v632
        %640 = vmatprep.subr.mxu0 0.0
        %641 = vmatpush1.msra.mxu0 0.0
        %642 = vmatprep.subr.mxu0 0.0
        %643 = vmatpush1.msra.mxu0 0.0
        %644 = vmatprep.subr.mxu0 0.0
        %645 = vmatpush1.msra.mxu0 0.0
        %646 = vmatprep.subr.mxu0 0.0
        %647 = vmatpush1.msra.mxu0 0.0
        %648 = vmatprep.subr.mxu0 0.0
        %649 = vmatpush1.msra.mxu0 0.0
        %650 = vmatprep.subr.mxu0 0.0
        %651 = vmatpush1.msra.mxu0 0.0
        %652 = vmatprep.subr.mxu0 0.0
        %653 = vmatpush1.msra.mxu0 0.0
        %654 = vmatprep.subr.mxu0 0.0
        %655 = vmatpush1.msra.mxu0 0.0
        %656 = vmatprep.subr.mxu0 0.0
        %657 = vmatpush1.msra.mxu0 0.0
        %658 = vmatprep.subr.mxu0 0.0
        %659 = vmatpush1.msra.mxu0 0.0
        %660 = vmatprep.subr.mxu0 0.0
        %661 = vmatpush1.msra.mxu0 0.0
        %662 = vmatprep.subr.mxu0 0.0
        %663 = vmatpush1.msra.mxu0 0.0
        %664 = vmatprep.subr.mxu0 0.0
        %665 = vmatpush1.msra.mxu0 0.0
        %666 = vmatprep.subr.mxu0 0.0
        %667 = vmatpush1.msra.mxu0 0.0
        %668 = vmatprep.subr.mxu0 0.0
        %669 = vmatpush1.msra.mxu0 0.0
        %670 = vmatprep.subr.mxu0 0.0
        %671 = vmatpush1.msra.mxu0 0.0
        %672 = vmatprep.subr.mxu0 0.0
        %673 = vmatpush1.msra.mxu0 0.0
        %674 = vmatprep.subr.mxu0 0.0
        %675 = vmatpush1.msra.mxu0 0.0
        %676 = vmatprep.subr.mxu0 0.0
        %677 = vmatpush1.msra.mxu0 0.0
        %678 = vmatprep.subr.mxu0 0.0
        %679 = vmatpush1.msra.mxu0 0.0
        %680 = vmatprep.subr.mxu0 0.0
        %681 = vmatpush1.msra.mxu0 0.0
        %682 = vmatprep.subr.mxu0 0.0
        %683 = vmatpush1.msra.mxu0 0.0
        %684 = vmatprep.subr.mxu0 0.0
        %685 = vmatpush1.msra.mxu0 0.0
        %686 = vmatprep.subr.mxu0 0.0
        %687 = vmatpush1.msra.mxu0 0.0
        %688 = vmatprep.subr.mxu0 0.0
        %689 = vmatpush1.msra.mxu0 0.0
        %690 = vmatprep.subr.mxu0 0.0
        %691 = vmatpush1.msra.mxu0 0.0
        %692 = vmatprep.subr.mxu0 0.0
        %693 = vmatpush1.msra.mxu0 0.0
        %694 = vmatprep.subr.mxu0 0.0
        %695 = vmatpush1.msra.mxu0 0.0
        %696 = vmatprep.subr.mxu0 0.0
        %697 = vmatpush1.msra.mxu0 0.0
        %698 = vmatprep.subr.mxu0 0.0
        %699 = vmatpush1.msra.mxu0 0.0
        %700 = vmatprep.subr.mxu0 0.0
        %701 = vmatpush1.msra.mxu0 0.0
        %702 = vmatprep.mubr.f32.mxu0 0.0
        %703 = vmatmul.mubr.f32.gmra.mrb[0].mxu0 %v636
        %v704 = vpop.f32.mrb[0].mxu0
        %v705 = vadd.f32 %v633, %v704
        %v706 = vpop.f32.mrb[0].mxu0
        %707 = vdwg.mxu0
        %v708 = vlaneseq
        %v709 = vshrl.u32 %v708, 7
        %v710 = vsub.s32 0, %v709
        %v711 = vrot.slane %v705, %v710
        %712 = vst [vmem:[%s327] sm:$0xff] %v711
      $region60: #{embedding_model_forward.1} parent=51 // pred_fallthru
        _
      %p713 = scmp.lt.s32.totalorder %s24, 1
      %s714 = scalar_select %p713, %s24, 1
      %s715 = smul.addr %s714, 8
      %s716 = scalar_lea.vmem %s8, %s715
      // Predicated region
      $region61: #{embedding_model_forward.1} parent=51 // pred_check
        %p717 = pneg %p225
      $region62: #{embedding_model_forward.1} parent=51 // pred_check_branch
        %719 = sbr.rel (%p717) target = $region64
      $region63: #{embedding_model_forward.1} parent=51 // pred_region
        _
      $region64: #{embedding_model_forward.1} parent=51 // pred_fallthru
        _
    $region52: #{embedding_model_forward.1} parent=5 // pred_fallthru
      _
    %p720 = scmp.le.s32.totalorder 2, %s15
    // Predicated region
    $region65: #{embedding_model_forward.1} parent=5 // pred_check
      %p721 = pneg %p720
    $region66: #{embedding_model_forward.1} parent=5 // pred_check_branch
      %723 = sbr.rel (%p721) target = $region68
    $region67: #{embedding_model_forward.1} parent=5 // pred_region
      %s724 = ssub.s32 %s15, 2
      // Predicated region
      $region69: #{embedding_model_forward.1} parent=67 // pred_check
        %p725 = pneg %p231
      $region70: #{embedding_model_forward.1} parent=67 // pred_check_branch
        %727 = sbr.rel (%p725) target = $region72
      $region71: #{embedding_model_forward.1} parent=67 // pred_region
        %p728 = scmp.lt.s32.totalorder %s26, 1
        %s729 = scalar_select %p728, %s26, 1
        %s730 = smul.addr %s729, 8
        %s731 = scalar_lea.vmem %s8, %s730
      $region72: #{embedding_model_forward.1} parent=67 // pred_fallthru
        _
    $region68: #{embedding_model_forward.1} parent=5 // pred_fallthru
      _
  $region6: #{embedding_model_forward.1} parent=0 // loop_footer
    %s19 = sadd.s32 1, %s15
  $region7: #{embedding_model_forward.1} parent=0 // loop_footer_branch
    %14 = sbr.rel target = $region3
  $region8: #{embedding_model_forward.1} parent=0 // loop_exit
    _

</llo_original>
